<compile_context>
chip_gen: v6e
topology: v6e:2x2x1
jax: 0.10.0
libtpu: 0.0.40
codegen_flags: <defaults>
</compile_context>

<pallas_src>
import functools
import math

import jax
import jax.numpy as jnp
from jax import lax
from jax.experimental import pallas as pl
from jax.experimental.pallas import tpu as pltpu

_NEG_FILL = -1e30  # bias fill for padded label columns (self-masking softmax)


def _round_up(x, m):
    return ((x + m - 1) // m) * m


def _label_tiling(num_labels, tile_l):
    """Label-tile size (multiple of 128) and padded label count."""
    tl = min(tile_l, _round_up(max(num_labels, 128), 128))
    lp = _round_up(max(num_labels, tl), tl)
    return tl, lp


# -----------------------------------------------------------------------------
# Fused kernel: linear projection + online log-softmax + NLL + top-1 argmax.
# Grid = (batch tiles i [parallel], label tiles j [arbitrary]).
#   x_ref      : (TB, Dp)  bf16   activations tile
#   w_ref      : (Dp, TL)  bf16   weight tile (in_dim x labels)
#   b_ref      : (1,  TL)  f32    bias tile (-1e30 in padded label columns)
#   t_ref      : (TB, 1)   i32    targets
# outputs:
#   logits_ref : (TB, TL)  f32    logits tile (lane-dense store every step)
#   perex_ref  : (TB, 1)   f32    per-row NLL term (written on last L tile)
#   amax_ref   : (TB, 1)   i32    top-1 label index (written on last L tile)
# scratch (persist across the L axis):
#   m_sc, l_sc, tacc_sc : (TB, 1) f32 running max / exp-sum / target logit
#   idx_sc              : (TB, 1) i32 running first-max argmax
# -----------------------------------------------------------------------------
def _head_kernel(B, x_ref, w_ref, b_ref, t_ref,
                 logits_ref, perex_ref, amax_ref,
                 m_sc, l_sc, tacc_sc, idx_sc):
    i = pl.program_id(0)
    j = pl.program_id(1)
    nj = pl.num_programs(1)

    @pl.when(j == 0)
    def _():
        m_sc[...] = jnp.full(m_sc.shape, -jnp.inf, jnp.float32)
        l_sc[...] = jnp.zeros(l_sc.shape, jnp.float32)
        tacc_sc[...] = jnp.zeros(tacc_sc.shape, jnp.float32)
        idx_sc[...] = jnp.zeros(idx_sc.shape, jnp.int32)

    # bf16 x bf16 -> f32 MXU matmul; bias add in f32.  Padded label columns
    # already carry a -1e30 bias, so no per-tile column mask is needed.
    logits = (jnp.dot(x_ref[...], w_ref[...],
                      preferred_element_type=jnp.float32) + b_ref[...])
    logits_ref[...] = logits
    TB, TL = logits.shape

    col = lax.broadcasted_iota(jnp.int32, (TB, TL), 1) + j * TL   # global col

    # ---- one pass over the tile: row max / exp-sum / target pick / argmax --
    tile_max = jnp.max(logits, axis=1, keepdims=True)             # (TB, 1)
    m_old = m_sc[...]
    m_new = jnp.maximum(m_old, tile_max)

    p_sum = jnp.sum(jnp.exp(logits - m_new), axis=1, keepdims=True)
    l_sc[...] = l_sc[...] * jnp.exp(m_old - m_new) + p_sum
    m_sc[...] = m_new

    # Target logit: the target column lives in exactly one label tile.
    tacc_sc[...] += jnp.sum(jnp.where(col == t_ref[...], logits, 0.0),
                            axis=1, keepdims=True)

    # First-max argmax of the raw logits (== argmax of log_softmax).
    tile_idx = jnp.min(jnp.where(logits >= tile_max, col, jnp.int32(2 ** 30)),
                       axis=1, keepdims=True)
    idx_sc[...] = jnp.where(tile_max > m_old, tile_idx, idx_sc[...])

    @pl.when(j == nj - 1)
    def _():
        amax_ref[...] = idx_sc[...]
        per_ex = (m_sc[...] + jnp.log(l_sc[...])) - tacc_sc[...]
        row = lax.broadcasted_iota(jnp.int32, per_ex.shape, 0) + i * TB
        perex_ref[...] = jnp.where(row < B, per_ex, 0.0)   # padded rows -> 0


# -----------------------------------------------------------------------------
# Static-parameter preparation: pad + cast the Linear weight/bias ONCE,
# outside the per-call hot path.
# -----------------------------------------------------------------------------
def prepare_head_params(weight_t, bias, *, tile_l=512):
    """weight_t: (D, L) Linear weight transposed to (in_dim, labels);
    bias: (L,) or (1, L).  Returns (bf16 weight (Dp, Lp), f32 bias (1, Lp))."""
    D, L = weight_t.shape
    Dp = _round_up(max(D, 128), 128)
    TL, Lp = _label_tiling(L, tile_l)
    del TL
    w_p = jnp.zeros((Dp, Lp), jnp.bfloat16).at[:D, :L].set(
        weight_t.astype(jnp.bfloat16))
    b_p = jnp.full((1, Lp), _NEG_FILL, jnp.float32).at[:, :L].set(
        jnp.reshape(bias, (1, -1)).astype(jnp.float32))
    return w_p, b_p


# -----------------------------------------------------------------------------
# Forward: pad dynamic activations, run the fused tiled kernel, slice valid.
# -----------------------------------------------------------------------------
def torch_softmax_cross_entropy(x, w_p, b_p, target, *, num_labels,
                                tile_b=128, tile_l=512):
    """x: (B, D) f32, w_p/b_p from prepare_head_params, target: (B,) int.
    Returns (logits (B, L) f32, loss scalar f32, argmax (B, 1) i32)."""
    B, D = x.shape
    Dp, Lp = w_p.shape
    L = num_labels
    TL, Lp_expected = _label_tiling(L, tile_l)
    if Lp_expected != Lp:
        raise ValueError("prepare_head_params / forward tile_l mismatch")

    TB = min(tile_b, _round_up(max(B, 8), 8))
    Bp = _round_up(max(B, TB), TB)

    # Per-call padding only for the dynamic activation / targets.
    x_p = jnp.zeros((Bp, Dp), jnp.bfloat16).at[:B, :D].set(
        x.astype(jnp.bfloat16))
    t_p = jnp.zeros((Bp, 1), jnp.int32).at[:B, 0].set(target.astype(jnp.int32))

    grid = (Bp // TB, Lp // TL)

    # VMEM budget: double-buffered input/output tiles + scratch, with 2x
    # headroom, capped below v7x's 64 MiB physical VMEM.
    tile_bytes = (2 * TB * Dp * 2        # x tile (bf16), double buffered
                  + 2 * Dp * TL * 2      # w tile (bf16)
                  + 2 * TL * 4           # bias tile
                  + 2 * TB * 4           # target tile
                  + 2 * TB * TL * 4      # logits out tile (f32)
                  + 4 * TB * 4           # per_ex + argmax out tiles
                  + 4 * TB * 4)          # scratch
    vmem_limit = int(min(max(2 * tile_bytes, 8 << 20), 48 << 20))

    kernel = functools.partial(_head_kernel, B)

    logits_p, per_ex, amax_p = pl.pallas_call(
        kernel,
        out_shape=(
            jax.ShapeDtypeStruct((Bp, Lp), jnp.float32),
            jax.ShapeDtypeStruct((Bp, 1), jnp.float32),
            jax.ShapeDtypeStruct((Bp, 1), jnp.int32),
        ),
        grid_spec=pltpu.PrefetchScalarGridSpec(
            num_scalar_prefetch=0,
            grid=grid,
            in_specs=[
                pl.BlockSpec((TB, Dp), lambda i, j: (i, 0)),
                pl.BlockSpec((Dp, TL), lambda i, j: (0, j)),
                pl.BlockSpec((1, TL), lambda i, j: (0, j)),
                pl.BlockSpec((TB, 1), lambda i, j: (i, 0)),
            ],
            out_specs=(
                pl.BlockSpec((TB, TL), lambda i, j: (i, j)),
                pl.BlockSpec((TB, 1), lambda i, j: (i, 0)),
                pl.BlockSpec((TB, 1), lambda i, j: (i, 0)),
            ),
            scratch_shapes=[
                pltpu.VMEM((TB, 1), jnp.float32),   # running max
                pltpu.VMEM((TB, 1), jnp.float32),   # running exp-sum
                pltpu.VMEM((TB, 1), jnp.float32),   # target logit
                pltpu.VMEM((TB, 1), jnp.int32),     # running argmax
            ],
        ),
        compiler_params=pltpu.CompilerParams(
            dimension_semantics=("parallel", "arbitrary"),
            vmem_limit_bytes=vmem_limit,
        ),
    )(x_p, w_p, b_p, t_p)

    logits = logits_p[:B, :L]
    loss = jnp.sum(per_ex) / B          # padded rows contribute exactly 0
    argmax = amax_p[:B, :]
    return logits, loss, argmax


if __name__ == "__main__":
    # Small shapes consistent with the module: x = [batch, input_dim].
    B, D, L = 4, 128, 8

    key = jax.random.PRNGKey(0)
    kx, kw, kb, kt = jax.random.split(key, 4)

    x = jax.random.normal(kx, (B, D), jnp.float32)
    bound = 1.0 / math.sqrt(D)                      # PyTorch Linear init range
    weight_t = jax.random.uniform(kw, (D, L), jnp.float32, -bound, bound)
    bias = jax.random.uniform(kb, (1, L), jnp.float32, -bound, bound)
    target = jax.random.randint(kt, (B,), 0, L, dtype=jnp.int32)

    # Static params: pad + cast once, outside the per-call hot path.
    w_p, b_p = prepare_head_params(weight_t, bias)

    fwd = jax.jit(functools.partial(torch_softmax_cross_entropy, num_labels=L))
    logits, loss, argmax = fwd(x, w_p, b_p, target)
    jax.block_until_ready((logits, loss, argmax))

    # Reference (a): matched bf16-operand / f32-accumulate matmul.
    logits_bf = (jnp.dot(x.astype(jnp.bfloat16), weight_t.astype(jnp.bfloat16),
                         preferred_element_type=jnp.float32) + bias)
    logp_bf = jax.nn.log_softmax(logits_bf, axis=1)
    loss_bf = -jnp.mean(logp_bf[jnp.arange(B), target])

    # Reference (b): full-f32 module semantics (loose tolerance).
    logits_f32 = jnp.dot(x, weight_t, precision=lax.Precision.HIGHEST) + bias
    loss_f32 = -jnp.mean(
        jax.nn.log_softmax(logits_f32, axis=1)[jnp.arange(B), target])

    assert logits.shape == (B, L)
    assert loss.shape == ()
    assert argmax.shape == (B, 1)
    assert jnp.allclose(logits, logits_bf, atol=2e-3, rtol=2e-3)
    assert jnp.allclose(loss, loss_bf, atol=2e-3, rtol=2e-3)
    assert jnp.allclose(loss, loss_f32, atol=3e-2, rtol=3e-2)
    assert jnp.array_equal(argmax[:, 0], jnp.argmax(logits, axis=1))
    print("KERNEL_OK")
</pallas_src>

<mosaic_0001>
module attributes {stable_mosaic.version = 11 : i64} {
  func.func @_head_kernel(%arg0: i32, %arg1: i32, %arg2: memref<8x128xbf16, #tpu.memory_space<vmem>>, %arg3: memref<128x128xbf16, #tpu.memory_space<vmem>>, %arg4: memref<1x128xf32, #tpu.memory_space<vmem>>, %arg5: memref<8x1xi32, #tpu.memory_space<vmem>>, %arg6: memref<8x128xf32, #tpu.memory_space<vmem>>, %arg7: memref<8x1xf32, #tpu.memory_space<vmem>>, %arg8: memref<8x1xi32, #tpu.memory_space<vmem>>, %arg9: memref<8x1xf32, #tpu.memory_space<vmem>>, %arg10: memref<8x1xf32, #tpu.memory_space<vmem>>, %arg11: memref<8x1xf32, #tpu.memory_space<vmem>>, %arg12: memref<8x1xi32, #tpu.memory_space<vmem>>) attributes {dimension_semantics = [#tpu.dimension_semantics<parallel>, #tpu.dimension_semantics<arbitrary>], iteration_bounds = array<i64: 1, 1>, scalar_prefetch = 0 : i64, scratch_operands = 4 : i64, tpu.core_type = #tpu.core_type<tc>, window_params = [{transform_indices = @transform_0, window_bounds = array<i64: 8, 128>}, {transform_indices = @transform_1, window_bounds = array<i64: 128, 128>}, {transform_indices = @transform_2, window_bounds = array<i64: 1, 128>}, {transform_indices = @transform_3, window_bounds = array<i64: 8, 1>}, {transform_indices = @transform_4, window_bounds = array<i64: 8, 128>}, {transform_indices = @transform_5, window_bounds = array<i64: 8, 1>}, {transform_indices = @transform_6, window_bounds = array<i64: 8, 1>}]} {
    %c0_i32 = arith.constant 0 : i32
    %0 = arith.cmpi eq, %arg1, %c0_i32 : i32
    %1 = arith.extui %0 : i1 to i32
    %c0_i32_0 = arith.constant 0 : i32
    %2 = arith.cmpi ne, %1, %c0_i32_0 : i32
    scf.if %2 {
      %cst_33 = arith.constant 0xFF800000 : f32
      %53 = vector.broadcast %cst_33 : f32 to vector<8x1xf32>
      %c0_34 = arith.constant 0 : index
      %c0_35 = arith.constant 0 : index
      %54 = vector.load %arg9[%c0_34, %c0_35] : memref<8x1xf32, #tpu.memory_space<vmem>>, vector<8x1xf32>
      tpu.vector_store %arg9[%c0_34, %c0_35], %53 {strides = array<i32>} : memref<8x1xf32, #tpu.memory_space<vmem>>, vector<8x1xf32>,
      %cst_36 = arith.constant 0.000000e+00 : f32
      %55 = vector.broadcast %cst_36 : f32 to vector<8x1xf32>
      %c0_37 = arith.constant 0 : index
      %c0_38 = arith.constant 0 : index
      %56 = vector.load %arg10[%c0_37, %c0_38] : memref<8x1xf32, #tpu.memory_space<vmem>>, vector<8x1xf32>
      tpu.vector_store %arg10[%c0_37, %c0_38], %55 {strides = array<i32>} : memref<8x1xf32, #tpu.memory_space<vmem>>, vector<8x1xf32>,
      %cst_39 = arith.constant 0.000000e+00 : f32
      %57 = vector.broadcast %cst_39 : f32 to vector<8x1xf32>
      %c0_40 = arith.constant 0 : index
      %c0_41 = arith.constant 0 : index
      %58 = vector.load %arg11[%c0_40, %c0_41] : memref<8x1xf32, #tpu.memory_space<vmem>>, vector<8x1xf32>
      tpu.vector_store %arg11[%c0_40, %c0_41], %57 {strides = array<i32>} : memref<8x1xf32, #tpu.memory_space<vmem>>, vector<8x1xf32>,
      %c0_i32_42 = arith.constant 0 : i32
      %59 = vector.broadcast %c0_i32_42 : i32 to vector<8x1xi32>
      %c0_43 = arith.constant 0 : index
      %c0_44 = arith.constant 0 : index
      %60 = vector.load %arg12[%c0_43, %c0_44] : memref<8x1xi32, #tpu.memory_space<vmem>>, vector<8x1xi32>
      tpu.vector_store %arg12[%c0_43, %c0_44], %59 {strides = array<i32>} : memref<8x1xi32, #tpu.memory_space<vmem>>, vector<8x1xi32>,
    } else {
    }
    %c0 = arith.constant 0 : index
    %c0_1 = arith.constant 0 : index
    %3 = vector.load %arg2[%c0, %c0_1] : memref<8x128xbf16, #tpu.memory_space<vmem>>, vector<8x128xbf16>
    %c0_2 = arith.constant 0 : index
    %c0_3 = arith.constant 0 : index
    %4 = vector.load %arg3[%c0_2, %c0_3] : memref<128x128xbf16, #tpu.memory_space<vmem>>, vector<128x128xbf16>
    %cst = arith.constant dense<0.000000e+00> : vector<8x128xf32>
    %5 = tpu.matmul %3, %4, %cst {dimension_numbers = #tpu.dot_dimension_numbers<[1], [0], [0], [1], [0, 0, 1, 1], [], []>} : vector<8x128xbf16>, vector<128x128xbf16>, vector<8x128xf32> -> vector<8x128xf32>
    %c0_4 = arith.constant 0 : index
    %c0_5 = arith.constant 0 : index
    %6 = vector.load %arg4[%c0_4, %c0_5] : memref<1x128xf32, #tpu.memory_space<vmem>>, vector<1x128xf32>
    %7 = vector.broadcast %6 : vector<1x128xf32> to vector<8x128xf32>
    %8 = arith.addf %5, %7 : vector<8x128xf32>
    %c0_6 = arith.constant 0 : index
    %c0_7 = arith.constant 0 : index
    %9 = vector.load %arg6[%c0_6, %c0_7] : memref<8x128xf32, #tpu.memory_space<vmem>>, vector<8x128xf32>
    tpu.vector_store %arg6[%c0_6, %c0_7], %8 {strides = array<i32>} : memref<8x128xf32, #tpu.memory_space<vmem>>, vector<8x128xf32>,
    %10 = tpu.iota {dimensions = array<i32: 1>} : vector<8x128xi32>
    %c128_i32 = arith.constant 128 : i32
    %11 = arith.muli %arg1, %c128_i32 : i32
    %12 = vector.broadcast %11 : i32 to vector<8x128xi32>
    %13 = arith.addi %10, %12 : vector<8x128xi32>
    %cst_8 = arith.constant dense<0xFF800000> : vector<8xf32>
    %14 = vector.multi_reduction <maximumf>, %8, %cst_8 [1] : vector<8x128xf32> to vector<8xf32>
    %15 = vector.shape_cast %14 : vector<8xf32> to vector<8x1xf32>
    %c0_9 = arith.constant 0 : index
    %c0_10 = arith.constant 0 : index
    %16 = vector.load %arg9[%c0_9, %c0_10] : memref<8x1xf32, #tpu.memory_space<vmem>>, vector<8x1xf32>
    %17 = arith.maximumf %16, %15 : vector<8x1xf32>
    %18 = vector.broadcast %17 : vector<8x1xf32> to vector<8x128xf32>
    %19 = arith.subf %8, %18 : vector<8x128xf32>
    %20 = math.exp %19 : vector<8x128xf32>
    %cst_11 = arith.constant dense<0.000000e+00> : vector<8xf32>
    %21 = vector.multi_reduction <add>, %20, %cst_11 [1] : vector<8x128xf32> to vector<8xf32>
    %22 = vector.shape_cast %21 : vector<8xf32> to vector<8x1xf32>
    %c0_12 = arith.constant 0 : index
    %c0_13 = arith.constant 0 : index
    %23 = vector.load %arg10[%c0_12, %c0_13] : memref<8x1xf32, #tpu.memory_space<vmem>>, vector<8x1xf32>
    %24 = arith.subf %16, %17 : vector<8x1xf32>
    %25 = math.exp %24 : vector<8x1xf32>
    %26 = arith.mulf %23, %25 : vector<8x1xf32>
    %27 = arith.addf %26, %22 : vector<8x1xf32>
    %c0_14 = arith.constant 0 : index
    %c0_15 = arith.constant 0 : index
    %28 = vector.load %arg10[%c0_14, %c0_15] : memref<8x1xf32, #tpu.memory_space<vmem>>, vector<8x1xf32>
    tpu.vector_store %arg10[%c0_14, %c0_15], %27 {strides = array<i32>} : memref<8x1xf32, #tpu.memory_space<vmem>>, vector<8x1xf32>,
    %c0_16 = arith.constant 0 : index
    %c0_17 = arith.constant 0 : index
    %29 = vector.load %arg9[%c0_16, %c0_17] : memref<8x1xf32, #tpu.memory_space<vmem>>, vector<8x1xf32>
    tpu.vector_store %arg9[%c0_16, %c0_17], %17 {strides = array<i32>} : memref<8x1xf32, #tpu.memory_space<vmem>>, vector<8x1xf32>,
    %c0_18 = arith.constant 0 : index
    %c0_19 = arith.constant 0 : index
    %30 = vector.load %arg11[%c0_18, %c0_19] : memref<8x1xf32, #tpu.memory_space<vmem>>, vector<8x1xf32>
    %c0_20 = arith.constant 0 : index
    %c0_21 = arith.constant 0 : index
    %31 = vector.load %arg5[%c0_20, %c0_21] : memref<8x1xi32, #tpu.memory_space<vmem>>, vector<8x1xi32>
    %32 = vector.broadcast %31 : vector<8x1xi32> to vector<8x128xi32>
    %33 = arith.cmpi eq, %13, %32 : vector<8x128xi32>
    %cst_22 = arith.constant 0.000000e+00 : f32
    %34 = vector.broadcast %cst_22 : f32 to vector<8x128xf32>
    %35 = arith.select %33, %8, %34 : vector<8x128xi1>, vector<8x128xf32>
    %cst_23 = arith.constant dense<0.000000e+00> : vector<8xf32>
    %36 = vector.multi_reduction <add>, %35, %cst_23 [1] : vector<8x128xf32> to vector<8xf32>
    %37 = vector.shape_cast %36 : vector<8xf32> to vector<8x1xf32>
    %38 = arith.addf %30, %37 : vector<8x1xf32>
    %c0_24 = arith.constant 0 : index
    %c0_25 = arith.constant 0 : index
    %39 = vector.load %arg11[%c0_24, %c0_25] : memref<8x1xf32, #tpu.memory_space<vmem>>, vector<8x1xf32>
    tpu.vector_store %arg11[%c0_24, %c0_25], %38 {strides = array<i32>} : memref<8x1xf32, #tpu.memory_space<vmem>>, vector<8x1xf32>,
    %40 = vector.broadcast %15 : vector<8x1xf32> to vector<8x128xf32>
    %41 = arith.cmpf oge, %8, %40 : vector<8x128xf32>
    %c1073741824_i32 = arith.constant 1073741824 : i32
    %42 = vector.broadcast %c1073741824_i32 : i32 to vector<8x128xi32>
    %43 = arith.select %41, %13, %42 : vector<8x128xi1>, vector<8x128xi32>
    %cst_26 = arith.constant dense<2147483647> : vector<8xi32>
    %44 = vector.multi_reduction <minsi>, %43, %cst_26 [1] : vector<8x128xi32> to vector<8xi32>
    %45 = vector.shape_cast %44 : vector<8xi32> to vector<8x1xi32>
    %46 = arith.cmpf ogt, %15, %16 : vector<8x1xf32>
    %c0_27 = arith.constant 0 : index
    %c0_28 = arith.constant 0 : index
    %47 = vector.load %arg12[%c0_27, %c0_28] : memref<8x1xi32, #tpu.memory_space<vmem>>, vector<8x1xi32>
    %48 = arith.select %46, %45, %47 : vector<8x1xi1>, vector<8x1xi32>
    %c0_29 = arith.constant 0 : index
    %c0_30 = arith.constant 0 : index
    %49 = vector.load %arg12[%c0_29, %c0_30] : memref<8x1xi32, #tpu.memory_space<vmem>>, vector<8x1xi32>
    tpu.vector_store %arg12[%c0_29, %c0_30], %48 {strides = array<i32>} : memref<8x1xi32, #tpu.memory_space<vmem>>, vector<8x1xi32>,
    %c0_i32_31 = arith.constant 0 : i32
    %50 = arith.cmpi eq, %arg1, %c0_i32_31 : i32
    %51 = arith.extui %50 : i1 to i32
    %c0_i32_32 = arith.constant 0 : i32
    %52 = arith.cmpi ne, %51, %c0_i32_32 : i32
    scf.if %52 {
      %c0_33 = arith.constant 0 : index
      %c0_34 = arith.constant 0 : index
      %53 = vector.load %arg12[%c0_33, %c0_34] : memref<8x1xi32, #tpu.memory_space<vmem>>, vector<8x1xi32>
      %c0_35 = arith.constant 0 : index
      %c0_36 = arith.constant 0 : index
      %54 = vector.load %arg8[%c0_35, %c0_36] : memref<8x1xi32, #tpu.memory_space<vmem>>, vector<8x1xi32>
      tpu.vector_store %arg8[%c0_35, %c0_36], %53 {strides = array<i32>} : memref<8x1xi32, #tpu.memory_space<vmem>>, vector<8x1xi32>,
      %c0_37 = arith.constant 0 : index
      %c0_38 = arith.constant 0 : index
      %55 = vector.load %arg9[%c0_37, %c0_38] : memref<8x1xf32, #tpu.memory_space<vmem>>, vector<8x1xf32>
      %c0_39 = arith.constant 0 : index
      %c0_40 = arith.constant 0 : index
      %56 = vector.load %arg10[%c0_39, %c0_40] : memref<8x1xf32, #tpu.memory_space<vmem>>, vector<8x1xf32>
      %57 = math.log %56 : vector<8x1xf32>
      %58 = arith.addf %55, %57 : vector<8x1xf32>
      %c0_41 = arith.constant 0 : index
      %c0_42 = arith.constant 0 : index
      %59 = vector.load %arg11[%c0_41, %c0_42] : memref<8x1xf32, #tpu.memory_space<vmem>>, vector<8x1xf32>
      %60 = arith.subf %58, %59 : vector<8x1xf32>
      %61 = tpu.iota {dimensions = array<i32: 0>} : vector<8x1xi32>
      %c8_i32 = arith.constant 8 : i32
      %62 = arith.muli %arg0, %c8_i32 : i32
      %63 = vector.broadcast %62 : i32 to vector<8x1xi32>
      %64 = arith.addi %61, %63 : vector<8x1xi32>
      %c4_i32 = arith.constant 4 : i32
      %65 = vector.broadcast %c4_i32 : i32 to vector<8x1xi32>
      %66 = arith.cmpi slt, %64, %65 : vector<8x1xi32>
      %cst_43 = arith.constant 0.000000e+00 : f32
      %67 = vector.broadcast %cst_43 : f32 to vector<8x1xf32>
      %68 = arith.select %66, %60, %67 : vector<8x1xi1>, vector<8x1xf32>
      %c0_44 = arith.constant 0 : index
      %c0_45 = arith.constant 0 : index
      %69 = vector.load %arg7[%c0_44, %c0_45] : memref<8x1xf32, #tpu.memory_space<vmem>>, vector<8x1xf32>
      tpu.vector_store %arg7[%c0_44, %c0_45], %68 {strides = array<i32>} : memref<8x1xf32, #tpu.memory_space<vmem>>, vector<8x1xf32>,
    } else {
    }
    return
  }
  func.func @transform_0(%arg0: i32, %arg1: i32) -> (i32, i32) {
    %c0_i32 = arith.constant 0 : i32
    %c0_i32_0 = arith.constant 0 : i32
    return %arg0, %c0_i32 : i32, i32
  }
  func.func @transform_1(%arg0: i32, %arg1: i32) -> (i32, i32) {
    %c0_i32 = arith.constant 0 : i32
    %c0_i32_0 = arith.constant 0 : i32
    return %c0_i32, %arg1 : i32, i32
  }
  func.func @transform_2(%arg0: i32, %arg1: i32) -> (i32, i32) {
    %c0_i32 = arith.constant 0 : i32
    %c0_i32_0 = arith.constant 0 : i32
    return %c0_i32, %arg1 : i32, i32
  }
  func.func @transform_3(%arg0: i32, %arg1: i32) -> (i32, i32) {
    %c0_i32 = arith.constant 0 : i32
    %c0_i32_0 = arith.constant 0 : i32
    return %arg0, %c0_i32 : i32, i32
  }
  func.func @transform_4(%arg0: i32, %arg1: i32) -> (i32, i32) {
    %c0_i32 = arith.constant 0 : i32
    return %arg0, %arg1 : i32, i32
  }
  func.func @transform_5(%arg0: i32, %arg1: i32) -> (i32, i32) {
    %c0_i32 = arith.constant 0 : i32
    %c0_i32_0 = arith.constant 0 : i32
    return %arg0, %c0_i32 : i32, i32
  }
  func.func @transform_6(%arg0: i32, %arg1: i32) -> (i32, i32) {
    %c0_i32 = arith.constant 0 : i32
    %c0_i32_0 = arith.constant 0 : i32
    return %arg0, %c0_i32 : i32, i32
  }
}

</mosaic_0001>

<llo_original>
// kernel: torch_softmax_cross_entropy.1
$region0: #{torch_softmax_cross_entropy.1}
  #allocation0 [shape = 'u32[]', space=smem, size = 0x4, offset = 0x4, fixed_abs, tag = 'smem constant byte address 0x4 - core index']
  #allocation1 [shape = 'u32[144,128]{1,0:T(1,128)}', space=vmem, size = 0x12000, scoped, tag = 'internal scratch']
  #allocation2 [shape = 'f32[8,1]{1,0:T(8,128)}', space=vmem, size = 0x1000, scoped, tag = 'scratch operand']
  #allocation3 [shape = 'f32[8,1]{1,0:T(8,128)}', space=vmem, size = 0x1000, scoped, tag = 'scratch operand']
  #allocation4 [shape = 'f32[8,1]{1,0:T(8,128)}', space=vmem, size = 0x1000, scoped, tag = 'scratch operand']
  #allocation5 [shape = 's32[8,1]{1,0:T(8,128)}', space=vmem, size = 0x1000, scoped, tag = 'scratch operand']
  %s0 = inlined_call_operand.vmem [shape: bf16[8,128], index: 0, kind: input, shape index: {}]
  %s1 = inlined_call_operand.hbm [shape: bf16[128,128], index: 1, kind: input, shape index: {}]
  %s2 = inlined_call_operand.vmem [shape: f32[1,128], index: 2, kind: input, shape index: {}]
  %s3 = inlined_call_operand.vmem [shape: s32[8,1], index: 3, kind: input, shape index: {}]
  %s4 = inlined_call_operand.vmem [shape: f32[8,128], index: 4, kind: output, shape index: {0}]
  %s5 = inlined_call_operand.vmem [shape: f32[8,1], index: 5, kind: output, shape index: {1}]
  %s6 = inlined_call_operand.vmem [shape: s32[8,1], index: 6, kind: output, shape index: {2}]
  %7 = xla_tuple %s4, %s5, %s6
  %s8 = sld [smem:[#allocation0]]
  $region54: #{torch_softmax_cross_entropy.1} parent=0
    _
  %s10 = ssub.s32 1, %s8
  %s11 = scalar_select 0, %s10, %s8
  $region1: #{torch_softmax_cross_entropy.1} parent=0
    #allocation6 [shape = 'u8[32768]{0}', space=vmem, size = 0x8000, scoped, tag = 'input window, operand 1, single buffered']
    #allocation7 [shape = 's32[1]{0}', space=sflag, size = 0x4, scoped, tag = 'scoped memory for torch_softmax_cross_entropy.1']
    %12 = vsyncpa [#allocation7], 0
    // Predicated region
    $region2: #{torch_softmax_cross_entropy.1} parent=1 // pred_check
      _
    $region3: #{torch_softmax_cross_entropy.1} parent=1 // pred_check_branch
      %14 = sbr.rel (0) target = $region5
    $region4: #{torch_softmax_cross_entropy.1} parent=1 // pred_region
      _
    $region5: #{torch_softmax_cross_entropy.1} parent=1 // pred_fallthru
      _
    // Predicated region
    $region6: #{torch_softmax_cross_entropy.1} parent=1 // pred_check
      _
    $region7: #{torch_softmax_cross_entropy.1} parent=1 // pred_check_branch
      %16 = sbr.rel (0) target = $region9
    $region8: #{torch_softmax_cross_entropy.1} parent=1 // pred_region
      %s18 = ssub.s32 1024, 1024
      %19 = vsyncadd [#allocation7], %s18
      %s20 = sshll.u32 [#allocation6], 4
      %s21 = int_to_ptr.vmem [resolvable:$true] %s20
      %26 = dma.hbm_to_vmem [thread:$0]  %s1, 1024, %s21, [#allocation7], 64, 64, 4
    $region9: #{torch_softmax_cross_entropy.1} parent=1 // pred_fallthru
      _
    // Predicated region
    $region10: #{torch_softmax_cross_entropy.1} parent=1 // pred_check
      _
    $region11: #{torch_softmax_cross_entropy.1} parent=1 // pred_check_branch
      %28 = sbr.rel (0) target = $region13
    $region12: #{torch_softmax_cross_entropy.1} parent=1 // pred_region
      _
    $region13: #{torch_softmax_cross_entropy.1} parent=1 // pred_fallthru
      _
    // Predicated region
    $region14: #{torch_softmax_cross_entropy.1} parent=1 // pred_check
      _
    $region15: #{torch_softmax_cross_entropy.1} parent=1 // pred_check_branch
      %30 = sbr.rel (0) target = $region17
    $region16: #{torch_softmax_cross_entropy.1} parent=1 // pred_region
      _
    $region17: #{torch_softmax_cross_entropy.1} parent=1 // pred_fallthru
      _
    // Predicated region
    $region18: #{torch_softmax_cross_entropy.1} parent=1 // pred_check
      _
    $region19: #{torch_softmax_cross_entropy.1} parent=1 // pred_check_branch
      %32 = sbr.rel (0) target = $region21
    $region20: #{torch_softmax_cross_entropy.1} parent=1 // pred_region
      %33 = dma.done [#allocation7], 1024
    $region21: #{torch_softmax_cross_entropy.1} parent=1 // pred_fallthru
      _
    %p35 = scmp.eq.s32.totalorder 0, 0
    // Predicated region
    $region22: #{torch_softmax_cross_entropy.1} parent=1 // pred_check
      %p36 = pneg %p35
    $region23: #{torch_softmax_cross_entropy.1} parent=1 // pred_check_branch
      %38 = sbr.rel (%p36) target = $region25
    $region24: #{torch_softmax_cross_entropy.1} parent=1 // pred_region
      %vm39 = vcmask 7168
      %40 = vst.msk [vmem:[#allocation2] sm:$0xff] %vm39, -inf
      %41 = vst.msk [vmem:[#allocation3] sm:$0xff] %vm39, 0.0
      %42 = vst.msk [vmem:[#allocation4] sm:$0xff] %vm39, 0.0
      %43 = vst.msk [vmem:[#allocation5] sm:$0xff] %vm39, 0
    $region25: #{torch_softmax_cross_entropy.1} parent=1 // pred_fallthru
      _
    %v44 = vld [vmem:[%s0] sm:$0xf]
    %v45 = vld [vmem:[#allocation6] sm:$0xf]
    %v46 = vld [vmem:[#allocation6 + $0x4] sm:$0xf]
    %v47 = vld [vmem:[#allocation6 + $0x8] sm:$0xf]
    %v48 = vld [vmem:[#allocation6 + $0xc] sm:$0xf]
    %v49 = vld [vmem:[#allocation6 + $0x10] sm:$0xf]
    %v50 = vld [vmem:[#allocation6 + $0x14] sm:$0xf]
    %v51 = vld [vmem:[#allocation6 + $0x18] sm:$0xf]
    %v52 = vld [vmem:[#allocation6 + $0x1c] sm:$0xf]
    %v53 = vld [vmem:[#allocation6 + $0x20] sm:$0xf]
    %v54 = vld [vmem:[#allocation6 + $0x24] sm:$0xf]
    %v55 = vld [vmem:[#allocation6 + $0x28] sm:$0xf]
    %v56 = vld [vmem:[#allocation6 + $0x2c] sm:$0xf]
    %v57 = vld [vmem:[#allocation6 + $0x30] sm:$0xf]
    %v58 = vld [vmem:[#allocation6 + $0x34] sm:$0xf]
    %v59 = vld [vmem:[#allocation6 + $0x38] sm:$0xf]
    %v60 = vld [vmem:[#allocation6 + $0x3c] sm:$0xf]
    %v61 = vld [vmem:[%s2] sm:$0x1]
    %v63 = vlaneseq
    %v64 = vshrl.u32 %v63, 7
    %v65 = vsub.s32 0, %v64
    %v66 = vrot.slane %v61, %v65
    %v84 = vunpack.c.l.b16 %v45
    %v85 = vunpack.c.l.b16 %v46
    %v86 = vunpack.c.l.b16 %v47
    %v87 = vunpack.c.l.b16 %v48
    %v88 = vunpack.c.l.b16 %v49
    %v89 = vunpack.c.l.b16 %v50
    %v90 = vunpack.c.l.b16 %v51
    %v91 = vunpack.c.l.b16 %v52
    %v92 = vunpack.c.l.b16 %v53
    %v93 = vunpack.c.l.b16 %v54
    %v94 = vunpack.c.l.b16 %v55
    %v95 = vunpack.c.l.b16 %v56
    %v96 = vunpack.c.l.b16 %v57
    %v97 = vunpack.c.l.b16 %v58
    %v98 = vunpack.c.l.b16 %v59
    %v99 = vunpack.c.l.b16 %v60
    %v100 = vpack.c.b16 %v85, %v84
    %v101 = vpack.c.b16 %v87, %v86
    %v102 = vpack.c.b16 %v89, %v88
    %v103 = vpack.c.b16 %v91, %v90
    %v104 = vpack.c.b16 %v93, %v92
    %v105 = vpack.c.b16 %v95, %v94
    %v106 = vpack.c.b16 %v97, %v96
    %v107 = vpack.c.b16 %v99, %v98
    %116 = vmatprep.subr.bf16.mxu0 0
    %117 = vmatpush1.bf16.msra.mxu0 %v107
    %118 = vmatprep.subr.bf16.mxu0 0
    %119 = vmatpush1.bf16.msra.mxu0 %v106
    %120 = vmatprep.subr.bf16.mxu0 0
    %121 = vmatpush1.bf16.msra.mxu0 %v105
    %122 = vmatprep.subr.bf16.mxu0 0
    %123 = vmatpush1.bf16.msra.mxu0 %v104
    %124 = vmatprep.subr.bf16.mxu0 0
    %125 = vmatpush1.bf16.msra.mxu0 %v103
    %126 = vmatprep.subr.bf16.mxu0 0
    %127 = vmatpush1.bf16.msra.mxu0 %v102
    %128 = vmatprep.subr.bf16.mxu0 0
    %129 = vmatpush1.bf16.msra.mxu0 %v101
    %130 = vmatprep.subr.bf16.mxu0 0
    %131 = vmatpush1.bf16.msra.mxu0 %v100
    %132 = vmatprep.subr.bf16.mxu0 0
    %133 = vmatpush2.bf16.msra.mxu0 0
    %134 = vmatprep.subr.bf16.mxu0 0
    %135 = vmatpush2.bf16.msra.mxu0 0
    %136 = vmatprep.subr.bf16.mxu0 0
    %137 = vmatpush2.bf16.msra.mxu0 0
    %138 = vmatprep.subr.bf16.mxu0 0
    %139 = vmatpush2.bf16.msra.mxu0 0
    %140 = vmatprep.subr.bf16.mxu0 0
    %141 = vmatpush2.bf16.msra.mxu0 0
    %142 = vmatprep.subr.bf16.mxu0 0
    %143 = vmatpush2.bf16.msra.mxu0 0
    %144 = vmatprep.subr.bf16.mxu0 0
    %145 = vmatpush2.bf16.msra.mxu0 0
    %146 = vmatprep.subr.bf16.mxu0 0
    %147 = vmatpush2.bf16.msra.mxu0 0
    %148 = vmatprep.mubr.bf16.mxu0 0
    %149 = vmatmul.mubr.bf16.gmra.mxu0 %v44
    %v150 = vpop.f32.mrf.mxu0
    %v151 = vadd.f32 %v66, %v150
    %v152 = vpop.f32.mrf.mxu0
    %v153 = vpop.f32.mrf.mxu0
    %v154 = vpop.f32.mrf.mxu0
    %155 = vdwg.mxu0
    %156 = vst [vmem:[%s4] sm:$0xff] %v151
    %v157 = vlaneseq
    %v158 = vand.u32 %v157, 127
    %s159 = smul.u32 0, 128
    %v160 = vstv %s159
    %v161 = vadd.s32 %v158, %v160
    %162 = vmax.xlane.f32.xlu0 %v151
    %v163 = vpop.xlane.xlu0 %162
    %v164 = vld [vmem:[#allocation2] sm:$0xff]
    %v165 = vmax.f32 %v164, %v163
    %167 = vset.pattern.permute.xlu0 0
    %168 = vperm.xlu0 %167, %v165
    %v169 = vpop.permute.xlu0 %168
    %v171 = vsub.f32 %v151, %v169
    %v172 = vmul.f32 %v171, 1.442695
    %v173 = vpow.pop %v172
    %174 = vadd.xlane.f32.xlu0 %v173
    %v175 = vpop.xlane.xlu0 %174
    %v176 = vld [vmem:[#allocation3] sm:$0xff]
    %v177 = vsub.f32 %v164, %v165
    %v178 = vmul.f32 %v177, 1.442695
    %v179 = vpow.pop %v178
    %v180 = vmul.f32 %v176, %v179
    %v181 = vadd.f32 %v180, %v175
    %vm182 = vcmask 7168
    %183 = vst.msk [vmem:[#allocation3] sm:$0xff] %vm182, %v181
    %184 = vst.msk [vmem:[#allocation2] sm:$0xff] %vm182, %v165
    %v185 = vld [vmem:[#allocation4] sm:$0xff]
    %v186 = vld [vmem:[%s3] sm:$0xff]
    %187 = vset.pattern.permute.xlu0 0
    %188 = vperm.xlu0 %187, %v186
    %v189 = vpop.permute.xlu0 %188
    %vm190 = vcmp.eq.s32.totalorder %v161, %v189
    %v191 = vsel %vm190, %v151, 0.0
    %192 = vadd.xlane.f32.xlu0 %v191
    %v193 = vpop.xlane.xlu0 %192
    %v194 = vadd.f32 %v185, %v193
    %195 = vst.msk [vmem:[#allocation4] sm:$0xff] %vm182, %v194
    %vm196 = vcmp.ge.f32.partialorder %v151, %v163
    %v197 = vsel %vm196, %v161, 1073741824
    %v198 = vand.u32 %v197, 65535
    %v199 = vshra.s32 %v197, 16
    %v200 = vcvt.s32.f32 %v198
    %v201 = vcvt.s32.f32 %v199
    %202 = vmin.xlane.f32.xlu0 %v201
    %v203 = vpop.xlane.xlu0 %202
    %vm204 = vcmp.eq.f32.partialorder %v201, %v203
    %v205 = vsel %vm204, %v200, inf
    %206 = vmin.xlane.f32.xlu0 %v205
    %v207 = vpop.xlane.xlu0 %206
    %v208 = vcvt.f32.s32 %v207
    %v209 = vcvt.f32.s32 %v203
    %v210 = vshll.u32 %v209, 16
    %v211 = vadd.s32 %v210, %v208
    %vm212 = vcmp.gt.f32.partialorder %v163, %v164
    %v213 = vld [vmem:[#allocation5] sm:$0xff]
    %v214 = vsel %vm212, %v211, %v213
    %215 = vst.msk [vmem:[#allocation5] sm:$0xff] %vm182, %v214
    // Predicated region
    $region26: #{torch_softmax_cross_entropy.1} parent=1 // pred_check
      %p216 = pneg %p35
    $region27: #{torch_softmax_cross_entropy.1} parent=1 // pred_check_branch
      %218 = sbr.rel (%p216) target = $region29
    $region28: #{torch_softmax_cross_entropy.1} parent=1 // pred_region
      %v219 = vld [vmem:[#allocation5] sm:$0xff]
      %220 = vst.msk [vmem:[%s6] sm:$0xff] %vm182, %v219
      %v221 = vld [vmem:[#allocation2] sm:$0xff]
      %v222 = vld [vmem:[#allocation3] sm:$0xff]
      %v223 = vlog2.pop %v222
      %v224 = vmul.f32 %v223, 0.6931472
      %v225 = vadd.f32 %v221, %v224
      %v226 = vld [vmem:[#allocation4] sm:$0xff]
      %v227 = vsub.f32 %v225, %v226
      %v228 = vlaneseq
      %v229 = vshrl.u32 %v228, 7
      %s230 = smul.u32 0, 8
      %v231 = vstv %s230
      %v232 = vadd.s32 %v229, %v231
      %vm233 = vcmp.lt.s32.totalorder %v232, 4
      %v234 = vsel %vm233, %v227, 0.0
      %235 = vst.msk [vmem:[%s5] sm:$0xff] %vm182, %v234
    $region29: #{torch_softmax_cross_entropy.1} parent=1 // pred_fallthru
      _
    // Predicated region
    $region30: #{torch_softmax_cross_entropy.1} parent=1 // pred_check
      _
    $region31: #{torch_softmax_cross_entropy.1} parent=1 // pred_check_branch
      %237 = sbr.rel (0) target = $region33
    $region32: #{torch_softmax_cross_entropy.1} parent=1 // pred_region
      _
    $region33: #{torch_softmax_cross_entropy.1} parent=1 // pred_fallthru
      _
    // Predicated region
    $region34: #{torch_softmax_cross_entropy.1} parent=1 // pred_check
      _
    $region35: #{torch_softmax_cross_entropy.1} parent=1 // pred_check_branch
      %239 = sbr.rel (0) target = $region37
    $region36: #{torch_softmax_cross_entropy.1} parent=1 // pred_region
      _
    $region37: #{torch_softmax_cross_entropy.1} parent=1 // pred_fallthru
      _
    // Predicated region
    $region38: #{torch_softmax_cross_entropy.1} parent=1 // pred_check
      _
    $region39: #{torch_softmax_cross_entropy.1} parent=1 // pred_check_branch
      %241 = sbr.rel (0) target = $region41
    $region40: #{torch_softmax_cross_entropy.1} parent=1 // pred_region
      _
    $region41: #{torch_softmax_cross_entropy.1} parent=1 // pred_fallthru
      _
    // Predicated region
    $region42: #{torch_softmax_cross_entropy.1} parent=1 // pred_check
      _
    $region43: #{torch_softmax_cross_entropy.1} parent=1 // pred_check_branch
      %243 = sbr.rel (0) target = $region45
    $region44: #{torch_softmax_cross_entropy.1} parent=1 // pred_region
      _
    $region45: #{torch_softmax_cross_entropy.1} parent=1 // pred_fallthru
      _
    // Predicated region
    $region46: #{torch_softmax_cross_entropy.1} parent=1 // pred_check
      _
    $region47: #{torch_softmax_cross_entropy.1} parent=1 // pred_check_branch
      %245 = sbr.rel (0) target = $region49
    $region48: #{torch_softmax_cross_entropy.1} parent=1 // pred_region
      _
    $region49: #{torch_softmax_cross_entropy.1} parent=1 // pred_fallthru
      _
    // Predicated region
    $region50: #{torch_softmax_cross_entropy.1} parent=1 // pred_check
      _
    $region51: #{torch_softmax_cross_entropy.1} parent=1 // pred_check_branch
      %247 = sbr.rel (0) target = $region53
    $region52: #{torch_softmax_cross_entropy.1} parent=1 // pred_region
      _
    $region53: #{torch_softmax_cross_entropy.1} parent=1 // pred_fallthru
      _
    %248 = vsyncpa [#allocation7], 1

</llo_original>
